<compile_context>
chip_gen: v7x
topology: tpu7x:2x2x1
jax: 0.10.0
libtpu: 0.0.40
codegen_flags: <defaults>
</compile_context>

<pallas_src>
import functools

import jax
import jax.numpy as jnp
from jax.experimental import pallas as pl
from jax.experimental.pallas import tpu as pltpu


def _round_up(x, m):
    return (x + m - 1) // m * m


# ----------------------------------------------------------------------------
# Kernels
# ----------------------------------------------------------------------------

def _partial_down(x_ref, wgu_ref, wd_ref):
    """One intermediate block: fused gate/up projection, silu-gate, partial down."""
    # Single MXU push for gate|up (operands are bf16, accumulation f32).
    y = jnp.dot(x_ref[...], wgu_ref[...], preferred_element_type=jnp.float32)
    ti = y.shape[-1] // 2              # static; ti is a multiple of 128
    gate = y[:, :ti]
    up = y[:, ti:]
    # silu(gate) * up in f32 (EUP sigmoid, VPU muls).
    h = (gate * jax.nn.sigmoid(gate)) * up
    # Partial down projection for this intermediate block.
    return jnp.dot(h.astype(wd_ref.dtype), wd_ref[...],
                   preferred_element_type=jnp.float32)


def _glamlp_kernel_scratch(x_ref, wgu_ref, wd_ref, o_ref, acc_ref):
    """Variant with a separate f32 accumulator (used when output dtype != f32)."""
    j = pl.program_id(1)

    @pl.when(j == 0)
    def _():
        acc_ref[...] = jnp.zeros_like(acc_ref)

    acc_ref[...] += _partial_down(x_ref, wgu_ref, wd_ref)

    @pl.when(j == pl.num_programs(1) - 1)
    def _():
        o_ref[...] = acc_ref[...].astype(o_ref.dtype)


def _glamlp_kernel_accout(x_ref, wgu_ref, wd_ref, o_ref):
    """f32-output variant: accumulate directly into the resident output tile."""
    j = pl.program_id(1)

    @pl.when(j == 0)
    def _():
        o_ref[...] = jnp.zeros_like(o_ref)

    o_ref[...] += _partial_down(x_ref, wgu_ref, wd_ref)


# ----------------------------------------------------------------------------
# One-time weight preparation (do at parameter-load time, NOT per forward)
# ----------------------------------------------------------------------------

def prepare_glamlp_weights(wg, wd, *, ti=None, compute_dtype=jnp.bfloat16):
    """Prepare GLAMLP weights for the Pallas kernel.

    wg: (H, 2I)  gate_proj weight, pre-transposed to (in, out)
    wd: (I, H)   down_proj weight, pre-transposed to (in, out)

    Returns (wgu, wd_p, meta):
      wgu : (Hp, 2I)  gate/up interleaved per ti-block -> one (Hp, 2*ti) slab
            per grid step feeds a single MXU push.
      wd_p: (I, Hp)
      meta: {"ti": ...} (static kernel parameter)
    """
    H, twoI = wg.shape
    I = twoI // 2
    assert wd.shape == (I, H)

    Hp = H if H <= 128 else _round_up(H, 128)

    if ti is None:
        ti = I
        for cand in (1024, 512, 256, 128):
            if I % cand == 0:
                ti = cand
                break
        # Keep the double-buffered weight slabs comfortably inside the smallest
        # (v7x) VMEM budget regardless of Hp.
        itemsize = jnp.dtype(compute_dtype).itemsize
        while ti > 128 and I % (ti // 2) == 0 and \
                2 * itemsize * 3 * ti * Hp > (24 << 20):
            ti //= 2
    assert I % ti == 0, "ti must divide the intermediate size"
    nblk = I // ti

    wgate = wg[:, :I]
    wup = wg[:, I:]
    # Interleave: columns [j*2ti, j*2ti+ti) = gate block j, next ti = up block j.
    wgu = jnp.concatenate(
        [wgate.reshape(H, nblk, ti), wup.reshape(H, nblk, ti)], axis=-1
    ).reshape(H, 2 * I)

    if Hp != H:
        wgu = jnp.pad(wgu, ((0, Hp - H), (0, 0)))
        wd = jnp.pad(wd, ((0, 0), (0, Hp - H)))

    wgu = wgu.astype(compute_dtype)
    wd_p = wd.astype(compute_dtype)
    return wgu, wd_p, {"ti": ti}


# ----------------------------------------------------------------------------
# Chip introspection (trace-time, cached)
# ----------------------------------------------------------------------------

@functools.lru_cache(maxsize=1)
def _chip_info():
    vmem_bytes = 64 << 20          # conservative default (v7x per-TC VMEM)
    num_cores = 1
    try:
        info = pltpu.get_tpu_info()
        vmem_bytes = int(getattr(info, "vmem_capacity_bytes", vmem_bytes))
        for attr in ("num_cores", "tensorcores_per_chip", "num_tensorcores",
                     "cores_per_chip"):
            v = getattr(info, attr, None)
            if isinstance(v, int) and v > 0:
                num_cores = v
                break
    except Exception:
        pass
    if vmem_bytes >= (128 << 20):          # v5e / v6e
        budget, limit = 96 << 20, 100 << 20
    else:                                  # v7x (64 MiB per TC)
        budget, limit = 44 << 20, 52 << 20
    return budget, limit, num_cores


# ----------------------------------------------------------------------------
# Forward
# ----------------------------------------------------------------------------

@functools.partial(jax.jit, static_argnames=("ti",))
def glamlp_forward(x, wgu, wd_p, *, ti):
    """GLAMLP forward with prepared weights.

    x   : (..., H) activations (any float dtype; output keeps this dtype)
    wgu : (Hp, 2I) prepared gate|up weights (see prepare_glamlp_weights)
    wd_p: (I, Hp)  prepared down-proj weights
    """
    orig_shape = x.shape
    out_dtype = x.dtype
    compute_dtype = wgu.dtype

    H = orig_shape[-1]
    Hp = wgu.shape[0]
    I = wd_p.shape[0]
    assert wgu.shape[1] == 2 * I and I % ti == 0

    M = 1
    for d in orig_shape[:-1]:
        M *= d
    x2d = x.reshape(M, H)

    budget, vmem_limit, num_cores = _chip_info()
    itemsize_w = jnp.dtype(compute_dtype).itemsize
    itemsize_x = jnp.dtype(compute_dtype).itemsize
    itemsize_o = jnp.dtype(out_dtype).itemsize
    use_scratch = out_dtype != jnp.float32

    # --- tile-size selection -------------------------------------------------
    def _need(tm_):
        per_step_w = itemsize_w * (Hp * 2 * ti + ti * Hp)      # wgu + wd slabs
        per_step_x = itemsize_x * tm_ * Hp
        per_step_o = itemsize_o * tm_ * Hp
        acc = (4 * tm_ * Hp) if use_scratch else 0
        return 2 * (per_step_w + per_step_x + per_step_o) + acc

    tm_cap = 512 if budget >= (96 << 20) else 256
    tm = min(_round_up(M, 8), tm_cap)
    while _need(tm) > budget and tm > 8:
        tm = max(8, _round_up(tm // 2, 8))

    # Keep both TensorCores busy (v7x): force >= 2 blocks on the parallel axis.
    if num_cores >= 2 and M > 8 and _round_up(M, tm) // tm < 2:
        tm = max(8, _round_up((M + 1) // 2, 8))

    Mp = _round_up(M, tm)
    if Mp != M or Hp != H:
        x2d = jnp.pad(x2d, ((0, Mp - M), (0, Hp - H)))
    # Cast activations once for bf16 MXU operands (also halves x DMA).
    x2d = x2d.astype(compute_dtype)

    grid = (Mp // tm, I // ti)
    n_m_blocks = grid[0]

    # Weights are re-streamed once per M tile; x read once; output written once.
    cost = pl.CostEstimate(
        flops=2 * Mp * Hp * 2 * I + 2 * Mp * I * Hp,
        transcendentals=Mp * I,
        bytes_accessed=(n_m_blocks * itemsize_w * (Hp * 2 * I + I * Hp)
                        + Mp * Hp * (itemsize_x + itemsize_o)),
    )

    in_specs = [
        pl.BlockSpec((tm, Hp), lambda i, j: (i, 0)),       # x tile (resident over j)
        pl.BlockSpec((Hp, 2 * ti), lambda i, j: (0, j)),   # gate|up weight slab j
        pl.BlockSpec((ti, Hp), lambda i, j: (j, 0)),       # down-proj weight slab j
    ]
    out_spec = pl.BlockSpec((tm, Hp), lambda i, j: (i, 0))

    if use_scratch:
        kernel = _glamlp_kernel_scratch
        scratch = [pltpu.VMEM((tm, Hp), jnp.float32)]
    else:
        kernel = _glamlp_kernel_accout
        scratch = []

    out = pl.pallas_call(
        kernel,
        out_shape=jax.ShapeDtypeStruct((Mp, Hp), out_dtype),
        grid_spec=pltpu.PrefetchScalarGridSpec(
            num_scalar_prefetch=0,
            grid=grid,
            in_specs=in_specs,
            out_specs=out_spec,
            scratch_shapes=scratch,
        ),
        compiler_params=pltpu.CompilerParams(
            dimension_semantics=("parallel", "arbitrary"),
            vmem_limit_bytes=vmem_limit,
        ),
        cost_estimate=cost,
    )(x2d, wgu, wd_p)

    return out[:M, :H].reshape(orig_shape)


# ----------------------------------------------------------------------------
# References
# ----------------------------------------------------------------------------

def glamlp_reference(x, wg, wd, compute_dtype=None):
    """Pure-JAX reference.  compute_dtype=None -> exact f32; else casts the
    matmul operands (to mirror the kernel's bf16-MXU / f32-accumulate path)."""
    H = x.shape[-1]
    I = wd.shape[0]
    x2d = x.reshape(-1, H)
    if compute_dtype is not None:
        x2d = x2d.astype(compute_dtype)
        wg = wg.astype(compute_dtype)
        wd = wd.astype(compute_dtype)
    y = jnp.dot(x2d, wg, preferred_element_type=jnp.float32)
    gate, up = y[:, :I], y[:, I:]
    h = (gate * jax.nn.sigmoid(gate)) * up
    if compute_dtype is not None:
        h = h.astype(compute_dtype)
    out = jnp.dot(h, wd, preferred_element_type=jnp.float32)
    return out.reshape(x.shape[:-1] + (H,)).astype(x.dtype)


if __name__ == "__main__":
    # Shapes implied by the module: hidden_size=32, hidden_ratio=4 (default)
    #   intermediate_size = round_up(int(32*4*2/3), 256) = 256
    hidden_size = 32
    hidden_ratio = 4
    intermediate_size = int(hidden_size * hidden_ratio * 2 / 3)
    intermediate_size = 256 * ((intermediate_size + 256 - 1) // 256)  # -> 256

    batch, seq = 2, 8
    key = jax.random.PRNGKey(0)
    kx, kg, kd = jax.random.split(key, 3)

    x = jax.random.normal(kx, (batch, seq, hidden_size), dtype=jnp.float32)
    # Deterministic synthetic weights (Linear(in,out) weight has shape (out,in);
    # stored pre-transposed as (in, out)).
    wg = (jax.random.normal(kg, (hidden_size, 2 * intermediate_size),
                            dtype=jnp.float32) * (1.0 / jnp.sqrt(hidden_size)))
    wd = (jax.random.normal(kd, (intermediate_size, hidden_size),
                            dtype=jnp.float32)
          * (1.0 / jnp.sqrt(intermediate_size)))

    # One-time weight preparation (bf16 MXU operands, gate/up interleave).
    wgu, wd_p, meta = prepare_glamlp_weights(wg, wd, compute_dtype=jnp.bfloat16)

    out = glamlp_forward(x, wgu, wd_p, ti=meta["ti"])
    jax.block_until_ready(out)

    # Check against a reference that mirrors the bf16-operand / f32-acc path.
    ref_bf16 = glamlp_reference(x, wg, wd, compute_dtype=jnp.bfloat16)
    assert jnp.allclose(out, ref_bf16, atol=5e-3, rtol=5e-3), \
        "mismatch vs bf16-operand reference"

    # Sanity check against the exact f32 module (bf16-input epsilon tolerance).
    ref_f32 = glamlp_reference(x, wg, wd)
    assert jnp.allclose(out, ref_f32, atol=1e-1, rtol=1e-1), \
        "mismatch vs f32 reference beyond bf16 tolerance"

    print("KERNEL_OK")
</pallas_src>

<mosaic_0001>
module attributes {stable_mosaic.version = 11 : i64} {
  func.func @_glamlp_kernel_accout(%arg0: i32, %arg1: i32, %arg2: memref<16x32xbf16, #tpu.memory_space<vmem>>, %arg3: memref<32x512xbf16, #tpu.memory_space<vmem>>, %arg4: memref<256x32xbf16, #tpu.memory_space<vmem>>, %arg5: memref<16x32xf32, #tpu.memory_space<vmem>>) attributes {dimension_semantics = [#tpu.dimension_semantics<parallel>, #tpu.dimension_semantics<arbitrary>], iteration_bounds = array<i64: 1, 1>, scalar_prefetch = 0 : i64, scratch_operands = 0 : i64, tpu.core_type = #tpu.core_type<tc>, window_params = [{transform_indices = @transform_0, window_bounds = array<i64: 16, 32>}, {transform_indices = @transform_1, window_bounds = array<i64: 32, 512>}, {transform_indices = @transform_2, window_bounds = array<i64: 256, 32>}, {transform_indices = @transform_3, window_bounds = array<i64: 16, 32>}]} {
    %c0_i32 = arith.constant 0 : i32
    %0 = arith.cmpi eq, %arg1, %c0_i32 : i32
    %1 = arith.extui %0 : i1 to i32
    %c0_i32_0 = arith.constant 0 : i32
    %2 = arith.cmpi ne, %1, %c0_i32_0 : i32
    scf.if %2 {
      %cst_12 = arith.constant 0.000000e+00 : f32
      %21 = vector.broadcast %cst_12 : f32 to vector<16x32xf32>
      %c0_13 = arith.constant 0 : index
      %c0_14 = arith.constant 0 : index
      %22 = vector.load %arg5[%c0_13, %c0_14] : memref<16x32xf32, #tpu.memory_space<vmem>>, vector<16x32xf32>
      tpu.vector_store %arg5[%c0_13, %c0_14], %21 {strides = array<i32>} : memref<16x32xf32, #tpu.memory_space<vmem>>, vector<16x32xf32>,
    } else {
    }
    %c0 = arith.constant 0 : index
    %c0_1 = arith.constant 0 : index
    %3 = vector.load %arg5[%c0, %c0_1] : memref<16x32xf32, #tpu.memory_space<vmem>>, vector<16x32xf32>
    %c0_2 = arith.constant 0 : index
    %c0_3 = arith.constant 0 : index
    %4 = vector.load %arg2[%c0_2, %c0_3] : memref<16x32xbf16, #tpu.memory_space<vmem>>, vector<16x32xbf16>
    %c0_4 = arith.constant 0 : index
    %c0_5 = arith.constant 0 : index
    %5 = vector.load %arg3[%c0_4, %c0_5] : memref<32x512xbf16, #tpu.memory_space<vmem>>, vector<32x512xbf16>
    %cst = arith.constant dense<0.000000e+00> : vector<16x512xf32>
    %6 = tpu.matmul %4, %5, %cst {dimension_numbers = #tpu.dot_dimension_numbers<[1], [0], [0], [1], [0, 0, 1, 1], [], []>} : vector<16x32xbf16>, vector<32x512xbf16>, vector<16x512xf32> -> vector<16x512xf32>
    %7 = vector.extract_strided_slice %6 {offsets = [0, 0], sizes = [16, 256], strides = [1, 1]} : vector<16x512xf32> to vector<16x256xf32>
    %8 = vector.extract_strided_slice %6 {offsets = [0, 256], sizes = [16, 256], strides = [1, 1]} : vector<16x512xf32> to vector<16x256xf32>
    %9 = arith.negf %7 : vector<16x256xf32>
    %10 = math.exp %9 : vector<16x256xf32>
    %cst_6 = arith.constant 1.000000e+00 : f32
    %11 = vector.broadcast %cst_6 : f32 to vector<16x256xf32>
    %12 = arith.addf %11, %10 : vector<16x256xf32>
    %13 = arith.divf %11, %12 : vector<16x256xf32>
    %14 = arith.mulf %7, %13 : vector<16x256xf32>
    %15 = arith.mulf %14, %8 : vector<16x256xf32>
    %16 = arith.truncf %15 : vector<16x256xf32> to vector<16x256xbf16>
    %c0_7 = arith.constant 0 : index
    %c0_8 = arith.constant 0 : index
    %17 = vector.load %arg4[%c0_7, %c0_8] : memref<256x32xbf16, #tpu.memory_space<vmem>>, vector<256x32xbf16>
    %cst_9 = arith.constant dense<0.000000e+00> : vector<16x32xf32>
    %18 = tpu.matmul %16, %17, %cst_9 {dimension_numbers = #tpu.dot_dimension_numbers<[1], [0], [0], [1], [0, 0, 1, 1], [], []>} : vector<16x256xbf16>, vector<256x32xbf16>, vector<16x32xf32> -> vector<16x32xf32>
    %19 = arith.addf %3, %18 : vector<16x32xf32>
    %c0_10 = arith.constant 0 : index
    %c0_11 = arith.constant 0 : index
    %20 = vector.load %arg5[%c0_10, %c0_11] : memref<16x32xf32, #tpu.memory_space<vmem>>, vector<16x32xf32>
    tpu.vector_store %arg5[%c0_10, %c0_11], %19 {strides = array<i32>} : memref<16x32xf32, #tpu.memory_space<vmem>>, vector<16x32xf32>,
    return
  }
  func.func @transform_0(%arg0: i32, %arg1: i32) -> (i32, i32) {
    %c0_i32 = arith.constant 0 : i32
    %c0_i32_0 = arith.constant 0 : i32
    return %arg0, %c0_i32 : i32, i32
  }
  func.func @transform_1(%arg0: i32, %arg1: i32) -> (i32, i32) {
    %c0_i32 = arith.constant 0 : i32
    %c0_i32_0 = arith.constant 0 : i32
    return %c0_i32, %arg1 : i32, i32
  }
  func.func @transform_2(%arg0: i32, %arg1: i32) -> (i32, i32) {
    %c0_i32 = arith.constant 0 : i32
    %c0_i32_0 = arith.constant 0 : i32
    return %arg1, %c0_i32 : i32, i32
  }
  func.func @transform_3(%arg0: i32, %arg1: i32) -> (i32, i32) {
    %c0_i32 = arith.constant 0 : i32
    %c0_i32_0 = arith.constant 0 : i32
    return %arg0, %c0_i32 : i32, i32
  }
}

</mosaic_0001>

<llo_original>
// kernel: glamlp_forward.1
$region0: #{glamlp_forward.1}
  #allocation0 [shape = 'u32[]', space=smem, size = 0x4, offset = 0x4, fixed_abs, tag = 'smem constant byte address 0x4 - core index']
  #allocation1 [shape = 'u32[144,128]{1,0:T(1,128)}', space=vmem, size = 0x12000, scoped, tag = 'internal scratch']
  %s0 = inlined_call_operand.vmem [shape: bf16[16,32], index: 0, kind: input, shape index: {}]
  %s1 = inlined_call_operand.vmem [shape: bf16[32,512], index: 1, kind: input, shape index: {}]
  %s2 = inlined_call_operand.vmem [shape: bf16[256,32], index: 2, kind: input, shape index: {}]
  %s3 = inlined_call_operand.hbm [shape: f32[16,32], index: 3, kind: output, shape index: {}]
  %s4 = sld [smem:[#allocation0]]
  $region26: #{glamlp_forward.1} parent=0
    _
  %s6 = ssub.s32 1, %s4
  %s7 = scalar_select 0, %s6, %s4
  $region1: #{glamlp_forward.1} parent=0
    #allocation2 [shape = 'u8[8192]{0}', space=vmem, size = 0x2000, scoped, tag = 'output window, operand 0, single buffered']
    #allocation3 [shape = 's32[1]{0}', space=sflag, size = 0x4, scoped, tag = 'scoped memory for glamlp_forward.1']
    %8 = vsyncpa [#allocation3], 0
    // Predicated region
    $region2: #{glamlp_forward.1} parent=1 // pred_check
      _
    $region3: #{glamlp_forward.1} parent=1 // pred_check_branch
      %10 = sbr.rel (0) target = $region5
    $region4: #{glamlp_forward.1} parent=1 // pred_region
      _
    $region5: #{glamlp_forward.1} parent=1 // pred_fallthru
      _
    // Predicated region
    $region6: #{glamlp_forward.1} parent=1 // pred_check
      _
    $region7: #{glamlp_forward.1} parent=1 // pred_check_branch
      %12 = sbr.rel (0) target = $region9
    $region8: #{glamlp_forward.1} parent=1 // pred_region
      _
    $region9: #{glamlp_forward.1} parent=1 // pred_fallthru
      _
    // Predicated region
    $region10: #{glamlp_forward.1} parent=1 // pred_check
      _
    $region11: #{glamlp_forward.1} parent=1 // pred_check_branch
      %14 = sbr.rel (0) target = $region13
    $region12: #{glamlp_forward.1} parent=1 // pred_region
      _
    $region13: #{glamlp_forward.1} parent=1 // pred_fallthru
      _
    %p16 = scmp.eq.s32.totalorder 0, 0
    // Predicated region
    $region14: #{glamlp_forward.1} parent=1 // pred_check
      %p17 = pneg %p16
    $region15: #{glamlp_forward.1} parent=1 // pred_check_branch
      %19 = sbr.rel (%p17) target = $region17
    $region16: #{glamlp_forward.1} parent=1 // pred_region
      %vm20 = vcmask 261120
      %21 = vst.msk [vmem:[#allocation2] sm:$0xff] %vm20, 0.0
      %22 = vst.msk [vmem:[#allocation2 + $0x8] sm:$0xff] %vm20, 0.0
    $region17: #{glamlp_forward.1} parent=1 // pred_fallthru
      _
    %v23 = vld [vmem:[#allocation2] sm:$0xff]
    %v24 = vld [vmem:[#allocation2 + $0x8] sm:$0xff]
    %v25 = vld [vmem:[%s0] sm:$0xf]
    %v26 = vld [vmem:[%s0 + $0x4] sm:$0xf]
    %v27 = vld [vmem:[%s1] sm:$0xff]
    %v28 = vld [vmem:[%s1 + $0x8] sm:$0xff]
    %v29 = vld [vmem:[%s1 + $0x10] sm:$0xff]
    %v30 = vld [vmem:[%s1 + $0x18] sm:$0xff]
    %v31 = vld [vmem:[%s1 + $0x20] sm:$0xff]
    %v32 = vld [vmem:[%s1 + $0x28] sm:$0xff]
    %v33 = vld [vmem:[%s1 + $0x30] sm:$0xff]
    %v34 = vld [vmem:[%s1 + $0x38] sm:$0xff]
    %v37 = vunpack.c.l.b16 %v25
    %v38 = vunpack.c.l.b16 %v26
    %v39 = vpack.c.b16 %v38, %v37
    %v48 = vunpack.c.l.b16 %v27
    %v49 = vunpack.c.h.b16 %v27
    %v50 = vunpack.c.l.b16 %v28
    %v51 = vunpack.c.h.b16 %v28
    %v52 = vunpack.c.l.b16 %v29
    %v53 = vunpack.c.h.b16 %v29
    %v54 = vunpack.c.l.b16 %v30
    %v55 = vunpack.c.h.b16 %v30
    %v56 = vunpack.c.l.b16 %v31
    %v57 = vunpack.c.h.b16 %v31
    %v58 = vunpack.c.l.b16 %v32
    %v59 = vunpack.c.h.b16 %v32
    %v60 = vunpack.c.l.b16 %v33
    %v61 = vunpack.c.h.b16 %v33
    %v62 = vunpack.c.l.b16 %v34
    %v63 = vunpack.c.h.b16 %v34
    %v64 = vpack.c.b16 %v52, %v48
    %v65 = vpack.c.b16 %v53, %v49
    %v66 = vpack.c.b16 %v54, %v50
    %v67 = vpack.c.b16 %v55, %v51
    %v68 = vpack.c.b16 %v60, %v56
    %v69 = vpack.c.b16 %v61, %v57
    %v70 = vpack.c.b16 %v62, %v58
    %v71 = vpack.c.b16 %v63, %v59
    %vm80 = vcmask 261120
    %v82 = vsel %vm80, %v39, 0
    %84 = vmatprep.subr.bf16.mxu0 %v65
    %85 = vmatpush1.bf16.msra.mxu0 %v64
    %86 = vmatprep.subr.bf16.mxu0 %v69
    %87 = vmatpush1.bf16.msra.mxu0 %v68
    %88 = vmatprep.subr.bf16.mxu0 0
    %89 = vmatpush1.bf16.msra.mxu0 0
    %90 = vmatprep.subr.bf16.mxu0 0
    %91 = vmatpush1.bf16.msra.mxu0 0
    %92 = vmatprep.subr.bf16.mxu0 0
    %93 = vmatpush1.bf16.msra.mxu0 0
    %94 = vmatprep.subr.bf16.mxu0 0
    %95 = vmatpush1.bf16.msra.mxu0 0
    %96 = vmatprep.subr.bf16.mxu0 0
    %97 = vmatpush1.bf16.msra.mxu0 0
    %98 = vmatprep.subr.bf16.mxu0 0
    %99 = vmatpush1.bf16.msra.mxu0 0
    %100 = vmatprep.subr.bf16.mxu0 0
    %101 = vmatpush1.bf16.msra.mxu0 0
    %102 = vmatprep.subr.bf16.mxu0 0
    %103 = vmatpush1.bf16.msra.mxu0 0
    %104 = vmatprep.subr.bf16.mxu0 0
    %105 = vmatpush1.bf16.msra.mxu0 0
    %106 = vmatprep.subr.bf16.mxu0 0
    %107 = vmatpush1.bf16.msra.mxu0 0
    %108 = vmatprep.subr.bf16.mxu0 0
    %109 = vmatpush1.bf16.msra.mxu0 0
    %110 = vmatprep.subr.bf16.mxu0 0
    %111 = vmatpush1.bf16.msra.mxu0 0
    %112 = vmatprep.subr.bf16.mxu0 0
    %113 = vmatpush1.bf16.msra.mxu0 0
    %114 = vmatprep.subr.bf16.mxu0 0
    %115 = vmatpush1.bf16.msra.mxu0 0
    %116 = vmatprep.mubr.bf16.mxu0 0
    %117 = vmatmul.mubr.bf16.gmra.mrb[0].mxu0 %v82
    %v118 = vpop.f32.mrb[0].mxu0
    %v119 = vadd.f32 0.0, %v118
    %v120 = vpop.f32.mrb[0].mxu0
    %v121 = vadd.f32 0.0, %v120
    %v122 = vpop.f32.mrb[0].mxu0
    %v123 = vadd.f32 0.0, %v122
    %v124 = vpop.f32.mrb[0].mxu0
    %v125 = vadd.f32 0.0, %v124
    %126 = vdwg.mxu0
    %127 = vmatprep.subr.bf16.mxu0 %v67
    %128 = vmatpush1.bf16.msra.mxu0 %v66
    %129 = vmatprep.subr.bf16.mxu0 %v71
    %130 = vmatpush1.bf16.msra.mxu0 %v70
    %131 = vmatprep.subr.bf16.mxu0 0
    %132 = vmatpush1.bf16.msra.mxu0 0
    %133 = vmatprep.subr.bf16.mxu0 0
    %134 = vmatpush1.bf16.msra.mxu0 0
    %135 = vmatprep.subr.bf16.mxu0 0
    %136 = vmatpush1.bf16.msra.mxu0 0
    %137 = vmatprep.subr.bf16.mxu0 0
    %138 = vmatpush1.bf16.msra.mxu0 0
    %139 = vmatprep.subr.bf16.mxu0 0
    %140 = vmatpush1.bf16.msra.mxu0 0
    %141 = vmatprep.subr.bf16.mxu0 0
    %142 = vmatpush1.bf16.msra.mxu0 0
    %143 = vmatprep.subr.bf16.mxu0 0
    %144 = vmatpush1.bf16.msra.mxu0 0
    %145 = vmatprep.subr.bf16.mxu0 0
    %146 = vmatpush1.bf16.msra.mxu0 0
    %147 = vmatprep.subr.bf16.mxu0 0
    %148 = vmatpush1.bf16.msra.mxu0 0
    %149 = vmatprep.subr.bf16.mxu0 0
    %150 = vmatpush1.bf16.msra.mxu0 0
    %151 = vmatprep.subr.bf16.mxu0 0
    %152 = vmatpush1.bf16.msra.mxu0 0
    %153 = vmatprep.subr.bf16.mxu0 0
    %154 = vmatpush1.bf16.msra.mxu0 0
    %155 = vmatprep.subr.bf16.mxu0 0
    %156 = vmatpush1.bf16.msra.mxu0 0
    %157 = vmatprep.subr.bf16.mxu0 0
    %158 = vmatpush1.bf16.msra.mxu0 0
    %159 = vmatprep.mubr.bf16.mxu0 0
    %160 = vmatmul.mubr.bf16.gmra.mrb[0].mxu0 %v82
    %v161 = vpop.f32.mrb[0].mxu0
    %v162 = vadd.f32 0.0, %v161
    %v163 = vpop.f32.mrb[0].mxu0
    %v164 = vadd.f32 0.0, %v163
    %v165 = vpop.f32.mrb[0].mxu0
    %v166 = vadd.f32 0.0, %v165
    %v167 = vpop.f32.mrb[0].mxu0
    %v168 = vadd.f32 0.0, %v167
    %169 = vdwg.mxu0
    %v170 = vxor.u32 %v119, 2147483648
    %v171 = vxor.u32 %v121, 2147483648
    %v172 = vxor.u32 %v123, 2147483648
    %v173 = vxor.u32 %v125, 2147483648
    %v174 = vmul.f32 %v170, 1.442695
    %v175 = vpow.pop %v174
    %v176 = vmul.f32 %v171, 1.442695
    %v177 = vpow.pop %v176
    %v178 = vmul.f32 %v172, 1.442695
    %v179 = vpow.pop %v178
    %v180 = vmul.f32 %v173, 1.442695
    %v181 = vpow.pop %v180
    %v182 = vadd.f32 %v175, 1.0
    %v183 = vadd.f32 %v177, 1.0
    %v184 = vadd.f32 %v179, 1.0
    %v185 = vadd.f32 %v181, 1.0
    %v186 = vrcp.pop %v182
    %v187 = vmul.f32 1.0, %v186
    %v188 = vrcp.pop %v183
    %v189 = vmul.f32 1.0, %v188
    %v190 = vrcp.pop %v184
    %v191 = vmul.f32 1.0, %v190
    %v192 = vrcp.pop %v185
    %v193 = vmul.f32 1.0, %v192
    %v194 = vmul.f32 %v119, %v187
    %v195 = vmul.f32 %v121, %v189
    %v196 = vmul.f32 %v123, %v191
    %v197 = vmul.f32 %v125, %v193
    %v198 = vmul.f32 %v194, %v162
    %v199 = vmul.f32 %v195, %v164
    %v200 = vmul.f32 %v196, %v166
    %v201 = vmul.f32 %v197, %v168
    %v202 = vpack.c.bf16 %v200, %v198
    %v203 = vpack.c.bf16 %v201, %v199
    %v204 = vld [vmem:[%s2] sm:$0xf]
    %v205 = vld [vmem:[%s2 + $0x4] sm:$0xf]
    %v206 = vld [vmem:[%s2 + $0x8] sm:$0xf]
    %v207 = vld [vmem:[%s2 + $0xc] sm:$0xf]
    %v208 = vld [vmem:[%s2 + $0x10] sm:$0xf]
    %v209 = vld [vmem:[%s2 + $0x14] sm:$0xf]
    %v210 = vld [vmem:[%s2 + $0x18] sm:$0xf]
    %v211 = vld [vmem:[%s2 + $0x1c] sm:$0xf]
    %v212 = vld [vmem:[%s2 + $0x20] sm:$0xf]
    %v213 = vld [vmem:[%s2 + $0x24] sm:$0xf]
    %v214 = vld [vmem:[%s2 + $0x28] sm:$0xf]
    %v215 = vld [vmem:[%s2 + $0x2c] sm:$0xf]
    %v216 = vld [vmem:[%s2 + $0x30] sm:$0xf]
    %v217 = vld [vmem:[%s2 + $0x34] sm:$0xf]
    %v218 = vld [vmem:[%s2 + $0x38] sm:$0xf]
    %v219 = vld [vmem:[%s2 + $0x3c] sm:$0xf]
    %v220 = vld [vmem:[%s2 + $0x40] sm:$0xf]
    %v221 = vld [vmem:[%s2 + $0x44] sm:$0xf]
    %v222 = vld [vmem:[%s2 + $0x48] sm:$0xf]
    %v223 = vld [vmem:[%s2 + $0x4c] sm:$0xf]
    %v224 = vld [vmem:[%s2 + $0x50] sm:$0xf]
    %v225 = vld [vmem:[%s2 + $0x54] sm:$0xf]
    %v226 = vld [vmem:[%s2 + $0x58] sm:$0xf]
    %v227 = vld [vmem:[%s2 + $0x5c] sm:$0xf]
    %v228 = vld [vmem:[%s2 + $0x60] sm:$0xf]
    %v229 = vld [vmem:[%s2 + $0x64] sm:$0xf]
    %v230 = vld [vmem:[%s2 + $0x68] sm:$0xf]
    %v231 = vld [vmem:[%s2 + $0x6c] sm:$0xf]
    %v232 = vld [vmem:[%s2 + $0x70] sm:$0xf]
    %v233 = vld [vmem:[%s2 + $0x74] sm:$0xf]
    %v234 = vld [vmem:[%s2 + $0x78] sm:$0xf]
    %v235 = vld [vmem:[%s2 + $0x7c] sm:$0xf]
    %v268 = vunpack.c.l.b16 %v204
    %v269 = vunpack.c.l.b16 %v205
    %v270 = vunpack.c.l.b16 %v206
    %v271 = vunpack.c.l.b16 %v207
    %v272 = vunpack.c.l.b16 %v208
    %v273 = vunpack.c.l.b16 %v209
    %v274 = vunpack.c.l.b16 %v210
    %v275 = vunpack.c.l.b16 %v211
    %v276 = vunpack.c.l.b16 %v212
    %v277 = vunpack.c.l.b16 %v213
    %v278 = vunpack.c.l.b16 %v214
    %v279 = vunpack.c.l.b16 %v215
    %v280 = vunpack.c.l.b16 %v216
    %v281 = vunpack.c.l.b16 %v217
    %v282 = vunpack.c.l.b16 %v218
    %v283 = vunpack.c.l.b16 %v219
    %v284 = vunpack.c.l.b16 %v220
    %v285 = vunpack.c.l.b16 %v221
    %v286 = vunpack.c.l.b16 %v222
    %v287 = vunpack.c.l.b16 %v223
    %v288 = vunpack.c.l.b16 %v224
    %v289 = vunpack.c.l.b16 %v225
    %v290 = vunpack.c.l.b16 %v226
    %v291 = vunpack.c.l.b16 %v227
    %v292 = vunpack.c.l.b16 %v228
    %v293 = vunpack.c.l.b16 %v229
    %v294 = vunpack.c.l.b16 %v230
    %v295 = vunpack.c.l.b16 %v231
    %v296 = vunpack.c.l.b16 %v232
    %v297 = vunpack.c.l.b16 %v233
    %v298 = vunpack.c.l.b16 %v234
    %v299 = vunpack.c.l.b16 %v235
    %v300 = vpack.c.b16 %v269, %v268
    %v301 = vpack.c.b16 %v271, %v270
    %v302 = vpack.c.b16 %v273, %v272
    %v303 = vpack.c.b16 %v275, %v274
    %v304 = vpack.c.b16 %v277, %v276
    %v305 = vpack.c.b16 %v279, %v278
    %v306 = vpack.c.b16 %v281, %v280
    %v307 = vpack.c.b16 %v283, %v282
    %v308 = vpack.c.b16 %v285, %v284
    %v309 = vpack.c.b16 %v287, %v286
    %v310 = vpack.c.b16 %v289, %v288
    %v311 = vpack.c.b16 %v291, %v290
    %v312 = vpack.c.b16 %v293, %v292
    %v313 = vpack.c.b16 %v295, %v294
    %v314 = vpack.c.b16 %v297, %v296
    %v315 = vpack.c.b16 %v299, %v298
    %332 = vmatprep.subr.bf16.mxu0 0
    %333 = vmatpush1.bf16.msra.mxu0 %v300
    %334 = vmatprep.subr.bf16.mxu0 0
    %335 = vmatpush1.bf16.msra.mxu0 %v301
    %336 = vmatprep.subr.bf16.mxu0 0
    %337 = vmatpush1.bf16.msra.mxu0 %v302
    %338 = vmatprep.subr.bf16.mxu0 0
    %339 = vmatpush1.bf16.msra.mxu0 %v303
    %340 = vmatprep.subr.bf16.mxu0 0
    %341 = vmatpush1.bf16.msra.mxu0 %v304
    %342 = vmatprep.subr.bf16.mxu0 0
    %343 = vmatpush1.bf16.msra.mxu0 %v305
    %344 = vmatprep.subr.bf16.mxu0 0
    %345 = vmatpush1.bf16.msra.mxu0 %v306
    %346 = vmatprep.subr.bf16.mxu0 0
    %347 = vmatpush1.bf16.msra.mxu0 %v307
    %348 = vmatprep.subr.bf16.mxu0 0
    %349 = vmatpush1.bf16.msra.mxu0 %v308
    %350 = vmatprep.subr.bf16.mxu0 0
    %351 = vmatpush1.bf16.msra.mxu0 %v309
    %352 = vmatprep.subr.bf16.mxu0 0
    %353 = vmatpush1.bf16.msra.mxu0 %v310
    %354 = vmatprep.subr.bf16.mxu0 0
    %355 = vmatpush1.bf16.msra.mxu0 %v311
    %356 = vmatprep.subr.bf16.mxu0 0
    %357 = vmatpush1.bf16.msra.mxu0 %v312
    %358 = vmatprep.subr.bf16.mxu0 0
    %359 = vmatpush1.bf16.msra.mxu0 %v313
    %360 = vmatprep.subr.bf16.mxu0 0
    %361 = vmatpush1.bf16.msra.mxu0 %v314
    %362 = vmatprep.subr.bf16.mxu0 0
    %363 = vmatpush1.bf16.msra.mxu0 %v315
    %364 = vmatprep.mubr.bf16.mxu0 %v203
    %365 = vmatmul.mubr.bf16.gmra.mrb[0].mxu0 %v202
    %v366 = vpop.f32.mrb[0].mxu0
    %v367 = vadd.f32 0.0, %v366
    %v368 = vpop.f32.mrb[0].mxu0
    %v369 = vpop.f32.mrb[0].mxu0
    %v370 = vadd.f32 0.0, %v369
    %v371 = vpop.f32.mrb[0].mxu0
    %372 = vdwg.mxu0
    %v373 = vadd.f32 %v23, %v367
    %v374 = vadd.f32 %v24, %v370
    %375 = vst.msk [vmem:[#allocation2] sm:$0xff] %vm80, %v373
    %376 = vst.msk [vmem:[#allocation2 + $0x8] sm:$0xff] %vm80, %v374
    // Predicated region
    $region18: #{glamlp_forward.1} parent=1 // pred_check
      _
    $region19: #{glamlp_forward.1} parent=1 // pred_check_branch
      %378 = sbr.rel (0) target = $region21
    $region20: #{glamlp_forward.1} parent=1 // pred_region
      %s380 = ssub.s32 256, 256
      %381 = vsyncadd [#allocation3], %s380
      %s382 = sshll.u32 [#allocation2], 4
      %s383 = int_to_ptr.vmem [resolvable:$true] %s382
      %388 = dma.vmem_to_hbm [thread:$0]  %s383, 256, %s3, [#allocation3], 128, 128, 8
    $region21: #{glamlp_forward.1} parent=1 // pred_fallthru
      _
    // Predicated region
    $region22: #{glamlp_forward.1} parent=1 // pred_check
      _
    $region23: #{glamlp_forward.1} parent=1 // pred_check_branch
      %390 = sbr.rel (0) target = $region25
    $region24: #{glamlp_forward.1} parent=1 // pred_region
      %391 = dma.done [#allocation3], 256
    $region25: #{glamlp_forward.1} parent=1 // pred_fallthru
      _
    %392 = vsyncpa [#allocation3], 1

</llo_original>
